<compile_context>
chip_gen: v6e
topology: v6e:2x2x1
jax: 0.10.0
libtpu: 0.0.40
codegen_flags: <defaults>
</compile_context>

<pallas_src>
import functools

import jax
import jax.numpy as jnp
from jax import lax
from jax.experimental import pallas as pl
from jax.experimental.pallas import tpu as pltpu


def _round_up(x, m):
    return (x + m - 1) // m * m


# ---------------------------------------------------------------------------
# Pass 1: conv (im2col matmul on the MXU, bf16 in / f32 acc) + per-channel
#         sum and sum-of-squares accumulated across all M tiles of a group.
# ---------------------------------------------------------------------------
def _conv_stats_kernel(p_ref, w_ref, y_ref, stats_ref, acc_ref):
    i = pl.program_id(1)

    @pl.when(i == 0)
    def _():
        acc_ref[...] = jnp.zeros_like(acc_ref)

    # (tm, Kp) @ (Kp, Cop) -> (tm, Cop), f32 accumulation on the MXU.
    y = jnp.dot(p_ref[0], w_ref[0], preferred_element_type=jnp.float32)
    y_ref[0] = y

    psum = jnp.sum(y, axis=0, keepdims=True)        # (1, Cop)
    psq = jnp.sum(y * y, axis=0, keepdims=True)     # (1, Cop)
    acc_ref[0:1, :] = acc_ref[0:1, :] + psum
    acc_ref[1:2, :] = acc_ref[1:2, :] + psq

    @pl.when(i == pl.num_programs(1) - 1)
    def _():
        stats_ref[0] = acc_ref[...]


# ---------------------------------------------------------------------------
# Pass 2: y * scale + shift (+ optional ReLU) with precomputed per-channel
#         scale/shift (single fused multiply-add per element).
# ---------------------------------------------------------------------------
def _bn_relu_kernel(y_ref, ab_ref, o_ref, *, apply_relu):
    ab = ab_ref[0]                     # (8, Cop); row 0 = scale, row 1 = shift
    scale = ab[0:1, :]
    shift = ab[1:2, :]
    out = y_ref[0] * scale + shift
    if apply_relu:
        out = jnp.maximum(out, 0.0)
    o_ref[0] = out.astype(o_ref.dtype)


def conv_bn_relu(x, weight, gamma, beta, *, stride=1, padding=0, groups=1,
                 is_relu=False, eps=1e-5, tm=256):
    """x: (N, C_in, H, W); weight: (C_out, C_in//groups, k, k) -> (N, C_out, Ho, Wo)."""
    n, c_in, h, w = x.shape
    c_out, c_in_g, k, _ = weight.shape
    assert c_in % groups == 0 and c_out % groups == 0 and c_in // groups == c_in_g
    co_g = c_out // groups
    gc = groups

    ho = (h + 2 * padding - k) // stride + 1
    wo = (w + 2 * padding - k) // stride + 1
    m = n * ho * wo
    kg = c_in_g * k * k

    # --- im2col via XLA patch extractor; feature order = (channel, kh, kw),
    #     matching weight.reshape(c_out, c_in_g*k*k). -------------------------
    patches = lax.conv_general_dilated_patches(
        x, filter_shape=(k, k), window_strides=(stride, stride),
        padding=((padding, padding), (padding, padding)),
        dimension_numbers=("NCHW", "OIHW", "NCHW"),
    )                                                   # (N, C_in*k*k, Ho, Wo)
    patches = patches.transpose(0, 2, 3, 1).reshape(m, gc, kg)
    patches = patches.transpose(1, 0, 2)                # (G, M, Kg)

    # --- pad to TPU-friendly tile sizes (lane-dense K and C_out). ------------
    tm = min(tm, _round_up(m, 8))
    mp = _round_up(m, tm)
    kp = _round_up(kg, 128)
    cop = _round_up(co_g, 128)
    n_m = mp // tm

    patches = jnp.pad(patches, ((0, 0), (0, mp - m), (0, kp - kg)))
    patches = patches.astype(jnp.bfloat16)              # bf16 MXU inputs

    w_mat = weight.reshape(gc, co_g, kg).transpose(0, 2, 1)      # (G, Kg, Cog)
    w_mat = jnp.pad(w_mat, ((0, 0), (0, kp - kg), (0, cop - co_g)))
    w_mat = w_mat.astype(jnp.bfloat16)

    # --- Pass 1: tiled matmul + global per-channel sum / sumsq ---------------
    y, stats = pl.pallas_call(
        _conv_stats_kernel,
        out_shape=(
            jax.ShapeDtypeStruct((gc, mp, cop), jnp.float32),
            jax.ShapeDtypeStruct((gc, 8, cop), jnp.float32),
        ),
        grid_spec=pltpu.PrefetchScalarGridSpec(
            num_scalar_prefetch=0,
            grid=(gc, n_m),
            in_specs=[
                pl.BlockSpec((1, tm, kp), lambda g, i: (g, i, 0)),
                pl.BlockSpec((1, kp, cop), lambda g, i: (g, 0, 0)),
            ],
            out_specs=(
                pl.BlockSpec((1, tm, cop), lambda g, i: (g, i, 0)),
                pl.BlockSpec((1, 8, cop), lambda g, i: (g, 0, 0)),
            ),
            scratch_shapes=[pltpu.VMEM((8, cop), jnp.float32)],
        ),
        compiler_params=pltpu.CompilerParams(
            dimension_semantics=("parallel", "arbitrary"),
            vmem_limit_bytes=48 * 1024 * 1024,
        ),
    )(patches, w_mat)

    # --- fold BN stats into per-channel scale / shift (done once, tiny). -----
    s1 = stats[:, 0, :]
    s2 = stats[:, 1, :]
    mean = s1 / m                                        # true row count (padding rows are 0)
    var = jnp.maximum(s2 / m - mean * mean, 0.0)         # biased variance (training-mode BN)
    gamma_p = jnp.pad(gamma.reshape(gc, co_g), ((0, 0), (0, cop - co_g)))
    beta_p = jnp.pad(beta.reshape(gc, co_g), ((0, 0), (0, cop - co_g)))
    scale = gamma_p * lax.rsqrt(var + eps)
    shift = beta_p - mean * scale
    ab = jnp.zeros((gc, 8, cop), jnp.float32)
    ab = ab.at[:, 0, :].set(scale).at[:, 1, :].set(shift)

    # --- Pass 2: normalize (+ ReLU), tiled over M ----------------------------
    kernel2 = functools.partial(_bn_relu_kernel, apply_relu=is_relu)
    out = pl.pallas_call(
        kernel2,
        out_shape=jax.ShapeDtypeStruct((gc, mp, cop), jnp.float32),
        grid_spec=pltpu.PrefetchScalarGridSpec(
            num_scalar_prefetch=0,
            grid=(gc, n_m),
            in_specs=[
                pl.BlockSpec((1, tm, cop), lambda g, i: (g, i, 0)),
                pl.BlockSpec((1, 8, cop), lambda g, i: (g, 0, 0)),
            ],
            out_specs=pl.BlockSpec((1, tm, cop), lambda g, i: (g, i, 0)),
        ),
        compiler_params=pltpu.CompilerParams(
            dimension_semantics=("parallel", "parallel"),
            vmem_limit_bytes=48 * 1024 * 1024,
        ),
    )(y, ab)

    # --- strip padding, back to NCHW (PyTorch layout) -------------------------
    out = out[:, :m, :co_g]                              # (G, M, Cog)
    out = out.transpose(1, 0, 2).reshape(n, ho, wo, c_out)
    return out.transpose(0, 3, 1, 2)


def _reference(x, weight, gamma, beta, *, stride, padding, groups, is_relu, eps=1e-5):
    y = lax.conv_general_dilated(
        x, weight, window_strides=(stride, stride),
        padding=((padding, padding), (padding, padding)),
        dimension_numbers=("NCHW", "OIHW", "NCHW"),
        feature_group_count=groups, precision=lax.Precision.HIGHEST)
    mean = jnp.mean(y, axis=(0, 2, 3), keepdims=True)
    var = jnp.mean((y - mean) ** 2, axis=(0, 2, 3), keepdims=True)
    y = (y - mean) * lax.rsqrt(var + eps)
    y = y * gamma.reshape(1, -1, 1, 1) + beta.reshape(1, -1, 1, 1)
    if is_relu:
        y = jnp.maximum(y, 0.0)
    return y


if __name__ == "__main__":
    # ConvBnRelu(in_channels=4, out_channels=8, kernel_size=3, stride=1, padding=1,
    #            groups=1, is_relu=True)
    N, C_IN, H, W = 2, 4, 16, 16
    C_OUT, K = 8, 3

    key = jax.random.PRNGKey(0)
    kx, kw = jax.random.split(key)
    x = jax.random.normal(kx, (N, C_IN, H, W), dtype=jnp.float32)
    weight = jax.random.normal(kw, (C_OUT, C_IN, K, K), dtype=jnp.float32) * 0.1  # bias=False
    gamma = jnp.ones((C_OUT,), dtype=jnp.float32)   # freshly-initialized BatchNorm2d
    beta = jnp.zeros((C_OUT,), dtype=jnp.float32)

    y = conv_bn_relu(x, weight, gamma, beta, stride=1, padding=1, groups=1, is_relu=True)
    jax.block_until_ready(y)
    assert y.shape == (N, C_OUT, H, W)

    y_ref = _reference(x, weight, gamma, beta, stride=1, padding=1, groups=1, is_relu=True)
    err = float(jnp.max(jnp.abs(y - y_ref)))
    assert jnp.allclose(y, y_ref, atol=5e-2, rtol=5e-2), err  # bf16 MXU inputs, f32 accumulate

    print("KERNEL_OK")
</pallas_src>

<mosaic_0001>
module attributes {stable_mosaic.version = 11 : i64} {
  func.func @_conv_stats_kernel(%arg0: i32, %arg1: i32, %arg2: memref<1x256x128xbf16, #tpu.memory_space<vmem>>, %arg3: memref<1x128x128xbf16, #tpu.memory_space<vmem>>, %arg4: memref<1x256x128xf32, #tpu.memory_space<vmem>>, %arg5: memref<1x8x128xf32, #tpu.memory_space<vmem>>, %arg6: memref<8x128xf32, #tpu.memory_space<vmem>>) attributes {dimension_semantics = [#tpu.dimension_semantics<parallel>, #tpu.dimension_semantics<arbitrary>], iteration_bounds = array<i64: 1, 2>, scalar_prefetch = 0 : i64, scratch_operands = 1 : i64, tpu.core_type = #tpu.core_type<tc>, window_params = [{transform_indices = @transform_0, window_bounds = array<i64: 1, 256, 128>}, {transform_indices = @transform_1, window_bounds = array<i64: 1, 128, 128>}, {transform_indices = @transform_2, window_bounds = array<i64: 1, 256, 128>}, {transform_indices = @transform_3, window_bounds = array<i64: 1, 8, 128>}]} {
    %c0_i32 = arith.constant 0 : i32
    %0 = arith.cmpi eq, %arg1, %c0_i32 : i32
    %1 = arith.extui %0 : i1 to i32
    %c0_i32_0 = arith.constant 0 : i32
    %2 = arith.cmpi ne, %1, %c0_i32_0 : i32
    scf.if %2 {
      %cst_19 = arith.constant 0.000000e+00 : f32
      %25 = vector.broadcast %cst_19 : f32 to vector<8x128xf32>
      %c0_20 = arith.constant 0 : index
      %c0_21 = arith.constant 0 : index
      %26 = vector.load %arg6[%c0_20, %c0_21] : memref<8x128xf32, #tpu.memory_space<vmem>>, vector<8x128xf32>
      tpu.vector_store %arg6[%c0_20, %c0_21], %25 {strides = array<i32>} : memref<8x128xf32, #tpu.memory_space<vmem>>, vector<8x128xf32>,
    } else {
    }
    %c0 = arith.constant 0 : index
    %c0_1 = arith.constant 0 : index
    %c0_2 = arith.constant 0 : index
    %3 = vector.load %arg2[%c0, %c0_1, %c0_2] : memref<1x256x128xbf16, #tpu.memory_space<vmem>>, vector<1x256x128xbf16>
    %4 = vector.shape_cast %3 : vector<1x256x128xbf16> to vector<256x128xbf16>
    %c0_3 = arith.constant 0 : index
    %c0_4 = arith.constant 0 : index
    %c0_5 = arith.constant 0 : index
    %5 = vector.load %arg3[%c0_3, %c0_4, %c0_5] : memref<1x128x128xbf16, #tpu.memory_space<vmem>>, vector<1x128x128xbf16>
    %6 = vector.shape_cast %5 : vector<1x128x128xbf16> to vector<128x128xbf16>
    %cst = arith.constant dense<0.000000e+00> : vector<256x128xf32>
    %7 = tpu.matmul %4, %6, %cst {dimension_numbers = #tpu.dot_dimension_numbers<[1], [0], [0], [1], [0, 0, 1, 1], [], []>} : vector<256x128xbf16>, vector<128x128xbf16>, vector<256x128xf32> -> vector<256x128xf32>
    %c0_6 = arith.constant 0 : index
    %c0_7 = arith.constant 0 : index
    %c0_8 = arith.constant 0 : index
    %8 = vector.load %arg4[%c0_6, %c0_7, %c0_8] : memref<1x256x128xf32, #tpu.memory_space<vmem>>, vector<1x256x128xf32>
    %9 = vector.shape_cast %8 : vector<1x256x128xf32> to vector<256x128xf32>
    %10 = vector.shape_cast %7 : vector<256x128xf32> to vector<1x256x128xf32>
    tpu.vector_store %arg4[%c0_6, %c0_7, %c0_8], %10 {strides = array<i32>} : memref<1x256x128xf32, #tpu.memory_space<vmem>>, vector<1x256x128xf32>,
    %cst_9 = arith.constant dense<0.000000e+00> : vector<128xf32>
    %11 = vector.multi_reduction <add>, %7, %cst_9 [0] : vector<256x128xf32> to vector<128xf32>
    %12 = vector.shape_cast %11 : vector<128xf32> to vector<1x128xf32>
    %13 = arith.mulf %7, %7 : vector<256x128xf32>
    %cst_10 = arith.constant dense<0.000000e+00> : vector<128xf32>
    %14 = vector.multi_reduction <add>, %13, %cst_10 [0] : vector<256x128xf32> to vector<128xf32>
    %15 = vector.shape_cast %14 : vector<128xf32> to vector<1x128xf32>
    %c0_11 = arith.constant 0 : index
    %c0_12 = arith.constant 0 : index
    %16 = vector.load %arg6[%c0_11, %c0_12] : memref<8x128xf32, #tpu.memory_space<vmem>>, vector<1x128xf32>
    %17 = arith.addf %16, %12 : vector<1x128xf32>
    %c0_13 = arith.constant 0 : index
    %c0_14 = arith.constant 0 : index
    %18 = vector.load %arg6[%c0_13, %c0_14] : memref<8x128xf32, #tpu.memory_space<vmem>>, vector<1x128xf32>
    tpu.vector_store %arg6[%c0_13, %c0_14], %17 {strides = array<i32>} : memref<8x128xf32, #tpu.memory_space<vmem>>, vector<1x128xf32>,
    %c1 = arith.constant 1 : index
    %c0_15 = arith.constant 0 : index
    %19 = vector.load %arg6[%c1, %c0_15] : memref<8x128xf32, #tpu.memory_space<vmem>>, vector<1x128xf32>
    %20 = arith.addf %19, %15 : vector<1x128xf32>
    %c1_16 = arith.constant 1 : index
    %c0_17 = arith.constant 0 : index
    %21 = vector.load %arg6[%c1_16, %c0_17] : memref<8x128xf32, #tpu.memory_space<vmem>>, vector<1x128xf32>
    tpu.vector_store %arg6[%c1_16, %c0_17], %20 {strides = array<i32>} : memref<8x128xf32, #tpu.memory_space<vmem>>, vector<1x128xf32>,
    %c1_i32 = arith.constant 1 : i32
    %22 = arith.cmpi eq, %arg1, %c1_i32 : i32
    %23 = arith.extui %22 : i1 to i32
    %c0_i32_18 = arith.constant 0 : i32
    %24 = arith.cmpi ne, %23, %c0_i32_18 : i32
    scf.if %24 {
      %c0_19 = arith.constant 0 : index
      %c0_20 = arith.constant 0 : index
      %25 = vector.load %arg6[%c0_19, %c0_20] : memref<8x128xf32, #tpu.memory_space<vmem>>, vector<8x128xf32>
      %c0_21 = arith.constant 0 : index
      %c0_22 = arith.constant 0 : index
      %c0_23 = arith.constant 0 : index
      %26 = vector.load %arg5[%c0_21, %c0_22, %c0_23] : memref<1x8x128xf32, #tpu.memory_space<vmem>>, vector<1x8x128xf32>
      %27 = vector.shape_cast %26 : vector<1x8x128xf32> to vector<8x128xf32>
      %28 = vector.shape_cast %25 : vector<8x128xf32> to vector<1x8x128xf32>
      tpu.vector_store %arg5[%c0_21, %c0_22, %c0_23], %28 {strides = array<i32>} : memref<1x8x128xf32, #tpu.memory_space<vmem>>, vector<1x8x128xf32>,
    } else {
    }
    return
  }
  func.func @transform_0(%arg0: i32, %arg1: i32) -> (i32, i32, i32) {
    %c0_i32 = arith.constant 0 : i32
    %c0_i32_0 = arith.constant 0 : i32
    return %arg0, %arg1, %c0_i32 : i32, i32, i32
  }
  func.func @transform_1(%arg0: i32, %arg1: i32) -> (i32, i32, i32) {
    %c0_i32 = arith.constant 0 : i32
    %c0_i32_0 = arith.constant 0 : i32
    %c0_i32_1 = arith.constant 0 : i32
    return %arg0, %c0_i32, %c0_i32_0 : i32, i32, i32
  }
  func.func @transform_2(%arg0: i32, %arg1: i32) -> (i32, i32, i32) {
    %c0_i32 = arith.constant 0 : i32
    %c0_i32_0 = arith.constant 0 : i32
    return %arg0, %arg1, %c0_i32 : i32, i32, i32
  }
  func.func @transform_3(%arg0: i32, %arg1: i32) -> (i32, i32, i32) {
    %c0_i32 = arith.constant 0 : i32
    %c0_i32_0 = arith.constant 0 : i32
    %c0_i32_1 = arith.constant 0 : i32
    return %arg0, %c0_i32, %c0_i32_0 : i32, i32, i32
  }
}

</mosaic_0001>

<llo_original>
// kernel: tpu_custom_call.1
$region0: #{tpu_custom_call.1}
  #allocation0 [shape = 'u32[]', space=smem, size = 0x4, offset = 0x4, fixed_abs, tag = 'smem constant byte address 0x4 - core index']
  #allocation1 [shape = 'u32[144,128]{1,0:T(1,128)}', space=vmem, size = 0x12000, scoped, tag = 'internal scratch']
  #allocation2 [shape = 'f32[8,128]{1,0:T(8,128)}', space=vmem, size = 0x1000, scoped, tag = 'scratch operand']
  %s0 = inlined_call_operand.hbm [shape: bf16[1,512,128], index: 0, kind: input, shape index: {}]
  %s1 = inlined_call_operand.hbm [shape: bf16[1,128,128], index: 1, kind: input, shape index: {}]
  %s2 = inlined_call_operand.hbm [shape: f32[1,512,128], index: 2, kind: output, shape index: {0}]
  %s3 = inlined_call_operand.hbm [shape: f32[1,8,128], index: 3, kind: output, shape index: {1}]
  %4 = xla_tuple %s2, %s3
  %s5 = sld [smem:[#allocation0]]
  $region65: #{tpu_custom_call.1} parent=0
    _
  %s7 = ssub.s32 1, %s5
  %s8 = scalar_select 0, %s7, %s5
  $region1: #{tpu_custom_call.1} parent=0
    #allocation3 [shape = 'u8[131072]{0}', space=vmem, size = 0x20000, scoped, tag = 'input window, operand 0']
    #allocation4 [shape = 's32[2]{0}', space=sflag, size = 0x8, scoped, tag = 'scoped memory for tpu_custom_call.1']
    #allocation5 [shape = 's32[2]{0}', space=sflag, size = 0x8, scoped, tag = 'scoped memory for tpu_custom_call.1']
    #allocation6 [shape = 'u8[32768]{0}', space=vmem, size = 0x8000, scoped, tag = 'input window, operand 1, single buffered']
    #allocation7 [shape = 's32[1]{0}', space=sflag, size = 0x4, scoped, tag = 'scoped memory for tpu_custom_call.1']
    #allocation8 [shape = 'u8[262144]{0}', space=vmem, size = 0x40000, scoped, tag = 'output window, operand 0']
    #allocation9 [shape = 'u8[4096]{0}', space=vmem, size = 0x1000, scoped, tag = 'output window, operand 1, single buffered']
    #allocation10 [shape = 's32[1]{0}', space=sflag, size = 0x4, scoped, tag = 'scoped memory for tpu_custom_call.1']
    %9 = vsyncpa [#allocation4], 0
    %s10 = scalar_lea.sflag [#allocation4], 1
    %11 = vsyncpa %s10, 0
    %12 = vsyncpa [#allocation7], 0
    %13 = vsyncpa [#allocation5], 0
    %s14 = scalar_lea.sflag [#allocation5], 1
    %15 = vsyncpa %s14, 0
    %16 = vsyncpa [#allocation10], 0
    loop: start=0, step=1, limit=4
    $region2: #{tpu_custom_call.1} parent=1 // loop_pre_header
      _
    $region3: #{tpu_custom_call.1} parent=1 // loop_header
      %s18 = sphi 0, %s22
      %p19 = scmp.ge.s32.totalorder %s18, 4
      %s25 = sphi 0, %s37
      %s26 = sphi 0, %s33
      %s27 = sphi 0, %s25
      %s28 = sphi 0, %s26
      %s29 = sphi 0, %s27
      %s30 = sphi 0, %s28
      %s42 = sphi 0, %s44
      %s45 = sphi 0, %s42
      %s46 = sphi 0, %s45
      %s62 = sphi 0, %s46
      %s68 = sphi 0, %s70
      %s71 = sphi 0, %s68
      %s72 = sphi 0, %s71
      %s88 = sphi 0, %s72
      %s96 = sphi 0, %s98
      %s99 = sphi 0, %s96
      %s100 = sphi 0, %s99
      %s116 = sphi 0, %s100
      %s122 = sphi 0, %s124
      %s125 = sphi 0, %s122
      %s126 = sphi 0, %s125
      %s142 = sphi 0, %s126
    $region4: #{tpu_custom_call.1} parent=1 // loop_header_branch
      %21 = sbr.rel (%p19) target = $region8
    $region5: #{tpu_custom_call.1} parent=1 // loop_body
      %s23 = ssub.s32 %s18, 1
      %s24 = ssub.s32 %s18, 2
      %s31 = sadd.s32 1, %s26
      %p32 = scmp.ge.s32.totalorder %s31, 2
      %s33 = scalar_select %p32, 0, %s31
      %s34 = sadd.s32 1, %s25
      %s35 = scalar_select %p32, %s34, %s25
      %p36 = scmp.ge.s32.totalorder %s35, 1
      %s37 = scalar_select %p36, 0, %s35
      %s38 = ssub.s32 %s25, %s37
      %s39 = ssub.s32 %s26, %s33
      %s40 = sor.u32 %s38, %s39
      %p41 = scmp.eq.s32.totalorder %s40, 0
      %s43 = sadd.s32 %s42, 1
      %s44 = scalar_select %p41, %s42, %s43
      %p47 = pneg %p41
      %p48 = scmp.eq.s32.totalorder %s18, 1
      %p49 = por %p47, %p48
      %p50 = scmp.ne.s32.totalorder %s42, %s45
      %p51 = scmp.eq.s32.totalorder %s18, 0
      %p52 = por %p50, %p51
      %p53 = scmp.ne.s32.totalorder %s42, %s45
      %p54 = scmp.eq.s32.totalorder %s23, 1
      %p55 = por %p53, %p54
      %p56 = scmp.ne.s32.totalorder %s45, %s46
      %p57 = scmp.eq.s32.totalorder %s23, 0
      %p58 = por %p56, %p57
      %p59 = scmp.ne.s32.totalorder %s45, %s46
      %p60 = scmp.eq.s32.totalorder %s24, 1
      %p61 = por %p59, %p60
      %p63 = scmp.ne.s32.totalorder %s46, %s62
      %p64 = scmp.eq.s32.totalorder %s24, 0
      %p65 = por %p63, %p64
      %s66 = ssub.s32 %s25, %s37
      %p67 = scmp.eq.s32.totalorder %s66, 0
      %s69 = sadd.s32 %s68, 1
      %s70 = scalar_select %p67, %s68, %s69
      %p73 = pneg %p67
      %p74 = scmp.eq.s32.totalorder %s18, 1
      %p75 = por %p73, %p74
      %p76 = scmp.ne.s32.totalorder %s68, %s71
      %p77 = scmp.eq.s32.totalorder %s18, 0
      %p78 = por %p76, %p77
      %p79 = scmp.ne.s32.totalorder %s68, %s71
      %p80 = scmp.eq.s32.totalorder %s23, 1
      %p81 = por %p79, %p80
      %p82 = scmp.ne.s32.totalorder %s71, %s72
      %p83 = scmp.eq.s32.totalorder %s23, 0
      %p84 = por %p82, %p83
      %p85 = scmp.ne.s32.totalorder %s71, %s72
      %p86 = scmp.eq.s32.totalorder %s24, 1
      %p87 = por %p85, %p86
      %p89 = scmp.ne.s32.totalorder %s72, %s88
      %p90 = scmp.eq.s32.totalorder %s24, 0
      %p91 = por %p89, %p90
      %s92 = ssub.s32 %s25, %s37
      %s93 = ssub.s32 %s26, %s33
      %s94 = sor.u32 %s92, %s93
      %p95 = scmp.eq.s32.totalorder %s94, 0
      %s97 = sadd.s32 %s96, 1
      %s98 = scalar_select %p95, %s96, %s97
      %p101 = pneg %p95
      %p102 = scmp.eq.s32.totalorder %s18, 1
      %p103 = por %p101, %p102
      %p104 = scmp.ne.s32.totalorder %s96, %s99
      %p105 = scmp.eq.s32.totalorder %s18, 0
      %p106 = por %p104, %p105
      %p107 = scmp.ne.s32.totalorder %s96, %s99
      %p108 = scmp.eq.s32.totalorder %s23, 1
      %p109 = por %p107, %p108
      %p110 = scmp.ne.s32.totalorder %s99, %s100
      %p111 = scmp.eq.s32.totalorder %s23, 0
      %p112 = por %p110, %p111
      %p113 = scmp.ne.s32.totalorder %s99, %s100
      %p114 = scmp.eq.s32.totalorder %s24, 1
      %p115 = por %p113, %p114
      %p117 = scmp.ne.s32.totalorder %s100, %s116
      %p118 = scmp.eq.s32.totalorder %s24, 0
      %p119 = por %p117, %p118
      %s120 = ssub.s32 %s25, %s37
      %p121 = scmp.eq.s32.totalorder %s120, 0
      %s123 = sadd.s32 %s122, 1
      %s124 = scalar_select %p121, %s122, %s123
      %p127 = pneg %p121
      %p128 = scmp.eq.s32.totalorder %s18, 1
      %p129 = por %p127, %p128
      %p130 = scmp.ne.s32.totalorder %s122, %s125
      %p131 = scmp.eq.s32.totalorder %s18, 0
      %p132 = por %p130, %p131
      %p133 = scmp.ne.s32.totalorder %s122, %s125
      %p134 = scmp.eq.s32.totalorder %s23, 1
      %p135 = por %p133, %p134
      %p136 = scmp.ne.s32.totalorder %s125, %s126
      %p137 = scmp.eq.s32.totalorder %s23, 0
      %p138 = por %p136, %p137
      %p139 = scmp.ne.s32.totalorder %s125, %s126
      %p140 = scmp.eq.s32.totalorder %s24, 1
      %p141 = por %p139, %p140
      %p143 = scmp.ne.s32.totalorder %s126, %s142
      %p144 = scmp.eq.s32.totalorder %s24, 0
      %p145 = por %p143, %p144
      %p146 = scmp.le.s32.totalorder 1, %s18
      %p147 = scmp.lt.s32.totalorder %s18, 3
      %p148 = pnand %p146, %p147
      %p149 = pneg %p148
      // Predicated region
      $region9: #{tpu_custom_call.1} parent=5 // pred_check
        _
      $region10: #{tpu_custom_call.1} parent=5 // pred_check_branch
        %151 = sbr.rel (%p148) target = $region12
      $region11: #{tpu_custom_call.1} parent=5 // pred_region
        %s152 = ssub.s32 %s18, 1
        // Predicated region
        $region13: #{tpu_custom_call.1} parent=11 // pred_check
          %p153 = pneg %p84
        $region14: #{tpu_custom_call.1} parent=11 // pred_check_branch
          %155 = sbr.rel (%p153) target = $region16
        $region15: #{tpu_custom_call.1} parent=11 // pred_region
          %s157 = ssub.s32 1024, 1024
          %158 = vsyncadd [#allocation7], %s157
          %s159 = smul.addr %s27, 16
          %s160 = smul.addr %s159, 64
          %s161 = scalar_lea.hbm %s1, %s160
          %s162 = sshll.u32 [#allocation6], 4
          %s163 = int_to_ptr.vmem [resolvable:$true] %s162
          %168 = dma.hbm_to_vmem [thread:$0]  %s161, 1024, %s163, [#allocation7], 64, 64, 4
        $region16: #{tpu_custom_call.1} parent=11 // pred_fallthru
          _
      $region12: #{tpu_custom_call.1} parent=5 // pred_fallthru
        _
      %p169 = scmp.lt.s32.totalorder %s18, 2
      // Predicated region
      $region17: #{tpu_custom_call.1} parent=5 // pred_check
        %p170 = pneg %p169
      $region18: #{tpu_custom_call.1} parent=5 // pred_check_branch
        %172 = sbr.rel (%p170) target = $region20
      $region19: #{tpu_custom_call.1} parent=5 // pred_region
        // Predicated region
        $region21: #{tpu_custom_call.1} parent=19 // pred_check
          %p173 = pneg %p52
        $region22: #{tpu_custom_call.1} parent=19 // pred_check_branch
          %175 = sbr.rel (%p173) target = $region24
        $region23: #{tpu_custom_call.1} parent=19 // pred_region
          %s176 = sand.u32 %s42, 1
          %s177 = scalar_lea.sflag [#allocation4], %s176
          %s178 = sand.u32 %s42, 1
          %s179 = smul.addr %s178, 128
          %s180 = scalar_lea.vmem [#allocation3], %s179
          %s181 = smul.u32 32, %s26
          %s183 = ssub.s32 2048, 2048
          %184 = vsyncadd %s177, %s183
          %s185 = smul.addr %s25, 64
          %s186 = sadd.s32 %s181, %s185
          %s187 = smul.addr %s186, 64
          %s188 = scalar_lea.hbm %s0, %s187
          %s189 = sshll.u32 %s180, 4
          %s190 = int_to_ptr.vmem [resolvable:$true] %s189
          %195 = dma.hbm_to_vmem [thread:$0]  %s188, 2048, %s190, %s177, 64, 64, 4
        $region24: #{tpu_custom_call.1} parent=19 // pred_fallthru
          _
      $region20: #{tpu_custom_call.1} parent=5 // pred_fallthru
        _
      %p196 = scmp.le.s32.totalorder 1, %s18
      %p197 = scmp.lt.s32.totalorder %s18, 3
      %p198 = pnand %p196, %p197
      %p199 = pneg %p198
      // Predicated region
      $region25: #{tpu_custom_call.1} parent=5 // pred_check
        _
      $region26: #{tpu_custom_call.1} parent=5 // pred_check_branch
        %201 = sbr.rel (%p198) target = $region28
      $region27: #{tpu_custom_call.1} parent=5 // pred_region
        %s202 = ssub.s32 %s18, 1
        %s203 = sand.u32 %s45, 1
        %s204 = scalar_lea.sflag [#allocation4], %s203
        %s205 = sand.u32 %s45, 1
        %s206 = smul.addr %s205, 128
        %s207 = scalar_lea.vmem [#allocation3], %s206
        // Predicated region
        $region29: #{tpu_custom_call.1} parent=27 // pred_check
          %p208 = pneg %p58
        $region30: #{tpu_custom_call.1} parent=27 // pred_check_branch
          %210 = sbr.rel (%p208) target = $region32
        $region31: #{tpu_custom_call.1} parent=27 // pred_region
          %211 = dma.done %s204, 2048
        $region32: #{tpu_custom_call.1} parent=27 // pred_fallthru
          _
        // Predicated region
        $region33: #{tpu_custom_call.1} parent=27 // pred_check
          %p212 = pneg %p84
        $region34: #{tpu_custom_call.1} parent=27 // pred_check_branch
          %214 = sbr.rel (%p212) target = $region36
        $region35: #{tpu_custom_call.1} parent=27 // pred_region
          %215 = dma.done [#allocation7], 1024
        $region36: #{tpu_custom_call.1} parent=27 // pred_fallthru
          _
        %s216 = sand.u32 %s45, 1
        %s217 = scalar_lea.sflag [#allocation4], %s216
        %s218 = sand.u32 %s45, 1
        %s219 = smul.addr %s218, 128
        %s220 = scalar_lea.vmem [#allocation3], %s219
        %p221 = pneg %p58
        %p222 = pneg %p55
        %p223 = pneg %p84
        %p224 = pneg %p81
        %p225 = pneg %p112
        %p226 = pneg %p109
        %s227 = sand.u32 %s99, 1
        %s228 = scalar_lea.sflag [#allocation5], %s227
        %s229 = sand.u32 %s99, 1
        %s230 = smul.addr %s229, 256
        %s231 = scalar_lea.vmem [#allocation8], %s230
        %p232 = pneg %p138
        %p233 = pneg %p135
        %s234 = smul.u32 32, %s28
        %s235 = smul.u32 32, %s28
        %p237 = scmp.eq.s32.totalorder %s28, 0
        // Predicated region
        $region37: #{tpu_custom_call.1} parent=27 // pred_check
          %p238 = pneg %p237
        $region38: #{tpu_custom_call.1} parent=27 // pred_check_branch
          %240 = sbr.rel (%p238) target = $region40
        $region39: #{tpu_custom_call.1} parent=27 // pred_region
          %241 = vst [vmem:[#allocation2] sm:$0xff] 0.0
        $region40: #{tpu_custom_call.1} parent=27 // pred_fallthru
          _
        %v242 = vld [vmem:[%s207] sm:$0xf]
        %v243 = vld [vmem:[%s207 + $0x4] sm:$0xf]
        %v244 = vld [vmem:[%s207 + $0x8] sm:$0xf]
        %v245 = vld [vmem:[%s207 + $0xc] sm:$0xf]
        %v246 = vld [vmem:[%s207 + $0x10] sm:$0xf]
        %v247 = vld [vmem:[%s207 + $0x14] sm:$0xf]
        %v248 = vld [vmem:[%s207 + $0x18] sm:$0xf]
        %v249 = vld [vmem:[%s207 + $0x1c] sm:$0xf]
        %v250 = vld [vmem:[%s207 + $0x20] sm:$0xf]
        %v251 = vld [vmem:[%s207 + $0x24] sm:$0xf]
        %v252 = vld [vmem:[%s207 + $0x28] sm:$0xf]
        %v253 = vld [vmem:[%s207 + $0x2c] sm:$0xf]
        %v254 = vld [vmem:[%s207 + $0x30] sm:$0xf]
        %v255 = vld [vmem:[%s207 + $0x34] sm:$0xf]
        %v256 = vld [vmem:[%s207 + $0x38] sm:$0xf]
        %v257 = vld [vmem:[%s207 + $0x3c] sm:$0xf]
        %v258 = vld [vmem:[%s207 + $0x40] sm:$0xf]
        %v259 = vld [vmem:[%s207 + $0x44] sm:$0xf]
        %v260 = vld [vmem:[%s207 + $0x48] sm:$0xf]
        %v261 = vld [vmem:[%s207 + $0x4c] sm:$0xf]
        %v262 = vld [vmem:[%s207 + $0x50] sm:$0xf]
        %v263 = vld [vmem:[%s207 + $0x54] sm:$0xf]
        %v264 = vld [vmem:[%s207 + $0x58] sm:$0xf]
        %v265 = vld [vmem:[%s207 + $0x5c] sm:$0xf]
        %v266 = vld [vmem:[%s207 + $0x60] sm:$0xf]
        %v267 = vld [vmem:[%s207 + $0x64] sm:$0xf]
        %v268 = vld [vmem:[%s207 + $0x68] sm:$0xf]
        %v269 = vld [vmem:[%s207 + $0x6c] sm:$0xf]
        %v270 = vld [vmem:[%s207 + $0x70] sm:$0xf]
        %v271 = vld [vmem:[%s207 + $0x74] sm:$0xf]
        %v272 = vld [vmem:[%s207 + $0x78] sm:$0xf]
        %v273 = vld [vmem:[%s207 + $0x7c] sm:$0xf]
        %v274 = vld [vmem:[#allocation6] sm:$0xf]
        %v275 = vld [vmem:[#allocation6 + $0x4] sm:$0xf]
        %v276 = vld [vmem:[#allocation6 + $0x8] sm:$0xf]
        %v277 = vld [vmem:[#allocation6 + $0xc] sm:$0xf]
        %v278 = vld [vmem:[#allocation6 + $0x10] sm:$0xf]
        %v279 = vld [vmem:[#allocation6 + $0x14] sm:$0xf]
        %v280 = vld [vmem:[#allocation6 + $0x18] sm:$0xf]
        %v281 = vld [vmem:[#allocation6 + $0x1c] sm:$0xf]
        %v282 = vld [vmem:[#allocation6 + $0x20] sm:$0xf]
        %v283 = vld [vmem:[#allocation6 + $0x24] sm:$0xf]
        %v284 = vld [vmem:[#allocation6 + $0x28] sm:$0xf]
        %v285 = vld [vmem:[#allocation6 + $0x2c] sm:$0xf]
        %v286 = vld [vmem:[#allocation6 + $0x30] sm:$0xf]
        %v287 = vld [vmem:[#allocation6 + $0x34] sm:$0xf]
        %v288 = vld [vmem:[#allocation6 + $0x38] sm:$0xf]
        %v289 = vld [vmem:[#allocation6 + $0x3c] sm:$0xf]
        %v322 = vunpack.c.l.b16 %v242
        %v323 = vunpack.c.l.b16 %v243
        %v324 = vunpack.c.l.b16 %v244
        %v325 = vunpack.c.l.b16 %v245
        %v326 = vunpack.c.l.b16 %v246
        %v327 = vunpack.c.l.b16 %v247
        %v328 = vunpack.c.l.b16 %v248
        %v329 = vunpack.c.l.b16 %v249
        %v330 = vunpack.c.l.b16 %v250
        %v331 = vunpack.c.l.b16 %v251
        %v332 = vunpack.c.l.b16 %v252
        %v333 = vunpack.c.l.b16 %v253
        %v334 = vunpack.c.l.b16 %v254
        %v335 = vunpack.c.l.b16 %v255
        %v336 = vunpack.c.l.b16 %v256
        %v337 = vunpack.c.l.b16 %v257
        %v338 = vunpack.c.l.b16 %v258
        %v339 = vunpack.c.l.b16 %v259
        %v340 = vunpack.c.l.b16 %v260
        %v341 = vunpack.c.l.b16 %v261
        %v342 = vunpack.c.l.b16 %v262
        %v343 = vunpack.c.l.b16 %v263
        %v344 = vunpack.c.l.b16 %v264
        %v345 = vunpack.c.l.b16 %v265
        %v346 = vunpack.c.l.b16 %v266
        %v347 = vunpack.c.l.b16 %v267
        %v348 = vunpack.c.l.b16 %v268
        %v349 = vunpack.c.l.b16 %v269
        %v350 = vunpack.c.l.b16 %v270
        %v351 = vunpack.c.l.b16 %v271
        %v352 = vunpack.c.l.b16 %v272
        %v353 = vunpack.c.l.b16 %v273
        %v354 = vpack.c.b16 %v323, %v322
        %v355 = vpack.c.b16 %v325, %v324
        %v356 = vpack.c.b16 %v327, %v326
        %v357 = vpack.c.b16 %v329, %v328
        %v358 = vpack.c.b16 %v331, %v330
        %v359 = vpack.c.b16 %v333, %v332
        %v360 = vpack.c.b16 %v335, %v334
        %v361 = vpack.c.b16 %v337, %v336
        %v362 = vpack.c.b16 %v339, %v338
        %v363 = vpack.c.b16 %v341, %v340
        %v364 = vpack.c.b16 %v343, %v342
        %v365 = vpack.c.b16 %v345, %v344
        %v366 = vpack.c.b16 %v347, %v346
        %v367 = vpack.c.b16 %v349, %v348
        %v368 = vpack.c.b16 %v351, %v350
        %v369 = vpack.c.b16 %v353, %v352
        %v402 = vunpack.c.l.b16 %v274
        %v403 = vunpack.c.l.b16 %v275
        %v404 = vunpack.c.l.b16 %v276
        %v405 = vunpack.c.l.b16 %v277
        %v406 = vunpack.c.l.b16 %v278
        %v407 = vunpack.c.l.b16 %v279
        %v408 = vunpack.c.l.b16 %v280
        %v409 = vunpack.c.l.b16 %v281
        %v410 = vunpack.c.l.b16 %v282
        %v411 = vunpack.c.l.b16 %v283
        %v412 = vunpack.c.l.b16 %v284
        %v413 = vunpack.c.l.b16 %v285
        %v414 = vunpack.c.l.b16 %v286
        %v415 = vunpack.c.l.b16 %v287
        %v416 = vunpack.c.l.b16 %v288
        %v417 = vunpack.c.l.b16 %v289
        %v418 = vpack.c.b16 %v403, %v402
        %v419 = vpack.c.b16 %v405, %v404
        %v420 = vpack.c.b16 %v407, %v406
        %v421 = vpack.c.b16 %v409, %v408
        %v422 = vpack.c.b16 %v411, %v410
        %v423 = vpack.c.b16 %v413, %v412
        %v424 = vpack.c.b16 %v415, %v414
        %v425 = vpack.c.b16 %v417, %v416
        %434 = vmatprep.subr.bf16.mxu0 0
        %435 = vmatpush1.bf16.msra.mxu0 %v425
        %436 = vmatprep.subr.bf16.mxu0 0
        %437 = vmatpush1.bf16.msra.mxu0 %v424
        %438 = vmatprep.subr.bf16.mxu0 0
        %439 = vmatpush1.bf16.msra.mxu0 %v423
        %440 = vmatprep.subr.bf16.mxu0 0
        %441 = vmatpush1.bf16.msra.mxu0 %v422
        %442 = vmatprep.subr.bf16.mxu0 0
        %443 = vmatpush1.bf16.msra.mxu0 %v421
        %444 = vmatprep.subr.bf16.mxu0 0
        %445 = vmatpush1.bf16.msra.mxu0 %v420
        %446 = vmatprep.subr.bf16.mxu0 0
        %447 = vmatpush1.bf16.msra.mxu0 %v419
        %448 = vmatprep.subr.bf16.mxu0 0
        %449 = vmatpush1.bf16.msra.mxu0 %v418
        %450 = vmatprep.subr.bf16.mxu0 0
        %451 = vmatpush2.bf16.msra.mxu0 0
        %452 = vmatprep.subr.bf16.mxu0 0
        %453 = vmatpush2.bf16.msra.mxu0 0
        %454 = vmatprep.subr.bf16.mxu0 0
        %455 = vmatpush2.bf16.msra.mxu0 0
        %456 = vmatprep.subr.bf16.mxu0 0
        %457 = vmatpush2.bf16.msra.mxu0 0
        %458 = vmatprep.subr.bf16.mxu0 0
        %459 = vmatpush2.bf16.msra.mxu0 0
        %460 = vmatprep.subr.bf16.mxu0 0
        %461 = vmatpush2.bf16.msra.mxu0 0
        %462 = vmatprep.subr.bf16.mxu0 0
        %463 = vmatpush2.bf16.msra.mxu0 0
        %464 = vmatprep.subr.bf16.mxu0 0
        %465 = vmatpush2.bf16.msra.mxu0 0
        %466 = vmatprep.mubr.bf16.mxu0 0
        %467 = vmatmul.mubr.bf16.gmra.mxu0 %v354
        %v468 = vpop.f32.mrf.mxu0
        %v469 = vadd.f32 0.0, %v468
        %v470 = vpop.f32.mrf.mxu0
        %v471 = vpop.f32.mrf.mxu0
        %v472 = vadd.f32 0.0, %v471
        %v473 = vpop.f32.mrf.mxu0
        %474 = vmatprep.mubr.bf16.mxu0 0
        %475 = vmatmul.mubr.bf16.gmra.mxu0 %v355
        %v476 = vpop.f32.mrf.mxu0
        %v477 = vadd.f32 0.0, %v476
        %v478 = vpop.f32.mrf.mxu0
        %v479 = vpop.f32.mrf.mxu0
        %v480 = vadd.f32 0.0, %v479
        %v481 = vpop.f32.mrf.mxu0
        %482 = vmatprep.mubr.bf16.mxu0 0
        %483 = vmatmul.mubr.bf16.gmra.mxu0 %v356
        %v484 = vpop.f32.mrf.mxu0
        %v485 = vadd.f32 0.0, %v484
        %v486 = vpop.f32.mrf.mxu0
        %v487 = vpop.f32.mrf.mxu0
        %v488 = vadd.f32 0.0, %v487
        %v489 = vpop.f32.mrf.mxu0
        %490 = vmatprep.mubr.bf16.mxu0 0
        %491 = vmatmul.mubr.bf16.gmra.mxu0 %v357
        %v492 = vpop.f32.mrf.mxu0
        %v493 = vadd.f32 0.0, %v492
        %v494 = vpop.f32.mrf.mxu0
        %v495 = vpop.f32.mrf.mxu0
        %v496 = vadd.f32 0.0, %v495
        %v497 = vpop.f32.mrf.mxu0
        %498 = vmatprep.mubr.bf16.mxu0 0
        %499 = vmatmul.mubr.bf16.gmra.mxu0 %v358
        %v500 = vpop.f32.mrf.mxu0
        %v501 = vadd.f32 0.0, %v500
        %v502 = vpop.f32.mrf.mxu0
        %v503 = vpop.f32.mrf.mxu0
        %v504 = vadd.f32 0.0, %v503
        %v505 = vpop.f32.mrf.mxu0
        %506 = vmatprep.mubr.bf16.mxu0 0
        %507 = vmatmul.mubr.bf16.gmra.mxu0 %v359
        %v508 = vpop.f32.mrf.mxu0
        %v509 = vadd.f32 0.0, %v508
        %v510 = vpop.f32.mrf.mxu0
        %v511 = vpop.f32.mrf.mxu0
        %v512 = vadd.f32 0.0, %v511
        %v513 = vpop.f32.mrf.mxu0
        %514 = vmatprep.mubr.bf16.mxu0 0
        %515 = vmatmul.mubr.bf16.gmra.mxu0 %v360
        %v516 = vpop.f32.mrf.mxu0
        %v517 = vadd.f32 0.0, %v516
        %v518 = vpop.f32.mrf.mxu0
        %v519 = vpop.f32.mrf.mxu0
        %v520 = vadd.f32 0.0, %v519
        %v521 = vpop.f32.mrf.mxu0
        %522 = vmatprep.mubr.bf16.mxu0 0
        %523 = vmatmul.mubr.bf16.gmra.mxu0 %v361
        %v524 = vpop.f32.mrf.mxu0
        %v525 = vadd.f32 0.0, %v524
        %v526 = vpop.f32.mrf.mxu0
        %v527 = vpop.f32.mrf.mxu0
        %v528 = vadd.f32 0.0, %v527
        %v529 = vpop.f32.mrf.mxu0
        %530 = vmatprep.mubr.bf16.mxu0 0
        %531 = vmatmul.mubr.bf16.gmra.mxu0 %v362
        %v532 = vpop.f32.mrf.mxu0
        %v533 = vadd.f32 0.0, %v532
        %v534 = vpop.f32.mrf.mxu0
        %v535 = vpop.f32.mrf.mxu0
        %v536 = vadd.f32 0.0, %v535
        %v537 = vpop.f32.mrf.mxu0
        %538 = vmatprep.mubr.bf16.mxu0 0
        %539 = vmatmul.mubr.bf16.gmra.mxu0 %v363
        %v540 = vpop.f32.mrf.mxu0
        %v541 = vadd.f32 0.0, %v540
        %v542 = vpop.f32.mrf.mxu0
        %v543 = vpop.f32.mrf.mxu0
        %v544 = vadd.f32 0.0, %v543
        %v545 = vpop.f32.mrf.mxu0
        %546 = vmatprep.mubr.bf16.mxu0 0
        %547 = vmatmul.mubr.bf16.gmra.mxu0 %v364
        %v548 = vpop.f32.mrf.mxu0
        %v549 = vadd.f32 0.0, %v548
        %v550 = vpop.f32.mrf.mxu0
        %v551 = vpop.f32.mrf.mxu0
        %v552 = vadd.f32 0.0, %v551
        %v553 = vpop.f32.mrf.mxu0
        %554 = vmatprep.mubr.bf16.mxu0 0
        %555 = vmatmul.mubr.bf16.gmra.mxu0 %v365
        %v556 = vpop.f32.mrf.mxu0
        %v557 = vadd.f32 0.0, %v556
        %v558 = vpop.f32.mrf.mxu0
        %v559 = vpop.f32.mrf.mxu0
        %v560 = vadd.f32 0.0, %v559
        %v561 = vpop.f32.mrf.mxu0
        %562 = vmatprep.mubr.bf16.mxu0 0
        %563 = vmatmul.mubr.bf16.gmra.mxu0 %v366
        %v564 = vpop.f32.mrf.mxu0
        %v565 = vadd.f32 0.0, %v564
        %v566 = vpop.f32.mrf.mxu0
        %v567 = vpop.f32.mrf.mxu0
        %v568 = vadd.f32 0.0, %v567
        %v569 = vpop.f32.mrf.mxu0
        %570 = vmatprep.mubr.bf16.mxu0 0
        %571 = vmatmul.mubr.bf16.gmra.mxu0 %v367
        %v572 = vpop.f32.mrf.mxu0
        %v573 = vadd.f32 0.0, %v572
        %v574 = vpop.f32.mrf.mxu0
        %v575 = vpop.f32.mrf.mxu0
        %v576 = vadd.f32 0.0, %v575
        %v577 = vpop.f32.mrf.mxu0
        %578 = vmatprep.mubr.bf16.mxu0 0
        %579 = vmatmul.mubr.bf16.gmra.mxu0 %v368
        %v580 = vpop.f32.mrf.mxu0
        %v581 = vadd.f32 0.0, %v580
        %v582 = vpop.f32.mrf.mxu0
        %v583 = vpop.f32.mrf.mxu0
        %v584 = vadd.f32 0.0, %v583
        %v585 = vpop.f32.mrf.mxu0
        %586 = vmatprep.mubr.bf16.mxu0 0
        %587 = vmatmul.mubr.bf16.gmra.mxu0 %v369
        %v588 = vpop.f32.mrf.mxu0
        %v589 = vadd.f32 0.0, %v588
        %v590 = vpop.f32.mrf.mxu0
        %v591 = vpop.f32.mrf.mxu0
        %v592 = vadd.f32 0.0, %v591
        %v593 = vpop.f32.mrf.mxu0
        %594 = vdwg.mxu0
        %595 = vst [vmem:[%s231] sm:$0xff] %v469
        %596 = vst [vmem:[%s231 + $0x8] sm:$0xff] %v472
        %597 = vst [vmem:[%s231 + $0x10] sm:$0xff] %v477
        %598 = vst [vmem:[%s231 + $0x18] sm:$0xff] %v480
        %599 = vst [vmem:[%s231 + $0x20] sm:$0xff] %v485
        %600 = vst [vmem:[%s231 + $0x28] sm:$0xff] %v488
        %601 = vst [vmem:[%s231 + $0x30] sm:$0xff] %v493
        %602 = vst [vmem:[%s231 + $0x38] sm:$0xff] %v496
        %603 = vst [vmem:[%s231 + $0x40] sm:$0xff] %v501
        %604 = vst [vmem:[%s231 + $0x48] sm:$0xff] %v504
        %605 = vst [vmem:[%s231 + $0x50] sm:$0xff] %v509
        %606 = vst [vmem:[%s231 + $0x58] sm:$0xff] %v512
        %607 = vst [vmem:[%s231 + $0x60] sm:$0xff] %v517
        %608 = vst [vmem:[%s231 + $0x68] sm:$0xff] %v520
        %609 = vst [vmem:[%s231 + $0x70] sm:$0xff] %v525
        %610 = vst [vmem:[%s231 + $0x78] sm:$0xff] %v528
        %611 = vst [vmem:[%s231 + $0x80] sm:$0xff] %v533
        %612 = vst [vmem:[%s231 + $0x88] sm:$0xff] %v536
        %613 = vst [vmem:[%s231 + $0x90] sm:$0xff] %v541
        %614 = vst [vmem:[%s231 + $0x98] sm:$0xff] %v544
        %615 = vst [vmem:[%s231 + $0xa0] sm:$0xff] %v549
        %616 = vst [vmem:[%s231 + $0xa8] sm:$0xff] %v552
        %617 = vst [vmem:[%s231 + $0xb0] sm:$0xff] %v557
        %618 = vst [vmem:[%s231 + $0xb8] sm:$0xff] %v560
        %619 = vst [vmem:[%s231 + $0xc0] sm:$0xff] %v565
        %620 = vst [vmem:[%s231 + $0xc8] sm:$0xff] %v568
        %621 = vst [vmem:[%s231 + $0xd0] sm:$0xff] %v573
        %622 = vst [vmem:[%s231 + $0xd8] sm:$0xff] %v576
        %623 = vst [vmem:[%s231 + $0xe0] sm:$0xff] %v581
        %624 = vst [vmem:[%s231 + $0xe8] sm:$0xff] %v584
        %625 = vst [vmem:[%s231 + $0xf0] sm:$0xff] %v589
        %626 = vst [vmem:[%s231 + $0xf8] sm:$0xff] %v592
        %v627 = vadd.f32 %v469, %v472
        %v628 = vadd.f32 %v627, %v477
        %v629 = vadd.f32 %v628, %v480
        %v630 = vadd.f32 %v629, %v485
        %v631 = vadd.f32 %v630, %v488
        %v632 = vadd.f32 %v631, %v493
        %v633 = vadd.f32 %v632, %v496
        %v634 = vadd.f32 %v633, %v501
        %v635 = vadd.f32 %v634, %v504
        %v636 = vadd.f32 %v635, %v509
        %v637 = vadd.f32 %v636, %v512
        %v638 = vadd.f32 %v637, %v517
        %v639 = vadd.f32 %v638, %v520
        %v640 = vadd.f32 %v639, %v525
        %v641 = vadd.f32 %v640, %v528
        %v642 = vadd.f32 %v641, %v533
        %v643 = vadd.f32 %v642, %v536
        %v644 = vadd.f32 %v643, %v541
        %v645 = vadd.f32 %v644, %v544
        %v646 = vadd.f32 %v645, %v549
        %v647 = vadd.f32 %v646, %v552
        %v648 = vadd.f32 %v647, %v557
        %v649 = vadd.f32 %v648, %v560
        %v650 = vadd.f32 %v649, %v565
        %v651 = vadd.f32 %v650, %v568
        %v652 = vadd.f32 %v651, %v573
        %v653 = vadd.f32 %v652, %v576
        %v654 = vadd.f32 %v653, %v581
        %v655 = vadd.f32 %v654, %v584
        %v656 = vadd.f32 %v655, %v589
        %v657 = vadd.f32 %v656, %v592
        %v658 = vrot.slane %v657, 4
        %v659 = vadd.f32 %v657, %v658
        %v660 = vrot.slane %v659, 2
        %v661 = vadd.f32 %v659, %v660
        %v662 = vrot.slane %v661, 1
        %v663 = vadd.f32 %v661, %v662
        %v664 = vmul.f32 %v469, %v469
        %v665 = vmul.f32 %v472, %v472
        %v666 = vmul.f32 %v477, %v477
        %v667 = vmul.f32 %v480, %v480
        %v668 = vmul.f32 %v485, %v485
        %v669 = vmul.f32 %v488, %v488
        %v670 = vmul.f32 %v493, %v493
        %v671 = vmul.f32 %v496, %v496
        %v672 = vmul.f32 %v501, %v501
        %v673 = vmul.f32 %v504, %v504
        %v674 = vmul.f32 %v509, %v509
        %v675 = vmul.f32 %v512, %v512
        %v676 = vmul.f32 %v517, %v517
        %v677 = vmul.f32 %v520, %v520
        %v678 = vmul.f32 %v525, %v525
        %v679 = vmul.f32 %v528, %v528
        %v680 = vmul.f32 %v533, %v533
        %v681 = vmul.f32 %v536, %v536
        %v682 = vmul.f32 %v541, %v541
        %v683 = vmul.f32 %v544, %v544
        %v684 = vmul.f32 %v549, %v549
        %v685 = vmul.f32 %v552, %v552
        %v686 = vmul.f32 %v557, %v557
        %v687 = vmul.f32 %v560, %v560
        %v688 = vmul.f32 %v565, %v565
        %v689 = vmul.f32 %v568, %v568
        %v690 = vmul.f32 %v573, %v573
        %v691 = vmul.f32 %v576, %v576
        %v692 = vmul.f32 %v581, %v581
        %v693 = vmul.f32 %v584, %v584
        %v694 = vmul.f32 %v589, %v589
        %v695 = vmul.f32 %v592, %v592
        %v696 = vadd.f32 %v664, %v665
        %v697 = vadd.f32 %v696, %v666
        %v698 = vadd.f32 %v697, %v667
        %v699 = vadd.f32 %v698, %v668
        %v700 = vadd.f32 %v699, %v669
        %v701 = vadd.f32 %v700, %v670
        %v702 = vadd.f32 %v701, %v671
        %v703 = vadd.f32 %v702, %v672
        %v704 = vadd.f32 %v703, %v673
        %v705 = vadd.f32 %v704, %v674
        %v706 = vadd.f32 %v705, %v675
        %v707 = vadd.f32 %v706, %v676
        %v708 = vadd.f32 %v707, %v677
        %v709 = vadd.f32 %v708, %v678
        %v710 = vadd.f32 %v709, %v679
        %v711 = vadd.f32 %v710, %v680
        %v712 = vadd.f32 %v711, %v681
        %v713 = vadd.f32 %v712, %v682
        %v714 = vadd.f32 %v713, %v683
        %v715 = vadd.f32 %v714, %v684
        %v716 = vadd.f32 %v715, %v685
        %v717 = vadd.f32 %v716, %v686
        %v718 = vadd.f32 %v717, %v687
        %v719 = vadd.f32 %v718, %v688
        %v720 = vadd.f32 %v719, %v689
        %v721 = vadd.f32 %v720, %v690
        %v722 = vadd.f32 %v721, %v691
        %v723 = vadd.f32 %v722, %v692
        %v724 = vadd.f32 %v723, %v693
        %v725 = vadd.f32 %v724, %v694
        %v726 = vadd.f32 %v725, %v695
        %v727 = vrot.slane %v726, 4
        %v728 = vadd.f32 %v726, %v727
        %v729 = vrot.slane %v728, 2
        %v730 = vadd.f32 %v728, %v729
        %v731 = vrot.slane %v730, 1
        %v732 = vadd.f32 %v730, %v731
        %v733 = vld [vmem:[#allocation2] sm:$0x1]
        %v734 = vadd.f32 %v733, %v663
        %735 = vst [vmem:[#allocation2] sm:$0x1] %v734
        %v736 = vld [vmem:[#allocation2 + $0x1] sm:$0x1]
        %v737 = vadd.f32 %v736, %v732
        %738 = vst [vmem:[#allocation2 + $0x1] sm:$0x1] %v737
        %p739 = scmp.eq.s32.totalorder %s28, 1
        // Predicated region
        $region41: #{tpu_custom_call.1} parent=27 // pred_check
          %p740 = pneg %p739
        $region42: #{tpu_custom_call.1} parent=27 // pred_check_branch
          %742 = sbr.rel (%p740) target = $region44
        $region43: #{tpu_custom_call.1} parent=27 // pred_region
          %v743 = vld [vmem:[#allocation2] sm:$0xff]
          %744 = vst [vmem:[#allocation9] sm:$0xff] %v743
        $region44: #{tpu_custom_call.1} parent=27 // pred_fallthru
          _
        %s745 = sand.u32 %s99, 1
        %s746 = scalar_lea.sflag [#allocation5], %s745
        %s747 = sand.u32 %s99, 1
        %s748 = smul.addr %s747, 256
        %s749 = scalar_lea.vmem [#allocation8], %s748
        // Predicated region
        $region45: #{tpu_custom_call.1} parent=27 // pred_check
          %p750 = pneg %p109
        $region46: #{tpu_custom_call.1} parent=27 // pred_check_branch
          %752 = sbr.rel (%p750) target = $region48
        $region47: #{tpu_custom_call.1} parent=27 // pred_region
          %s753 = smul.u32 32, %s28
          %s755 = ssub.s32 4096, 4096
          %756 = vsyncadd %s746, %s755
          %s757 = smul.addr %s27, 64
          %s758 = sadd.s32 %s753, %s757
          %s759 = smul.addr %s758, 128
          %s760 = scalar_lea.hbm %s2, %s759
          %s761 = sshll.u32 %s749, 4
          %s762 = int_to_ptr.vmem [resolvable:$true] %s761
          %767 = dma.vmem_to_hbm [thread:$0]  %s762, 4096, %s760, %s746, 128, 128, 8
        $region48: #{tpu_custom_call.1} parent=27 // pred_fallthru
          _
        // Predicated region
        $region49: #{tpu_custom_call.1} parent=27 // pred_check
          %p768 = pneg %p135
        $region50: #{tpu_custom_call.1} parent=27 // pred_check_branch
          %770 = sbr.rel (%p768) target = $region52
        $region51: #{tpu_custom_call.1} parent=27 // pred_region
          %s772 = ssub.s32 128, 128
          %773 = vsyncadd [#allocation10], %s772
          %s774 = smul.addr %s27, 128
          %s775 = scalar_lea.hbm %s3, %s774
          %s777 = sshll.u32 [#allocation9], 4
          %s778 = int_to_ptr.vmem [resolvable:$true] %s777
          %780 = dma.vmem_to_hbm [thread:$0]  %s778, 128, %s775, [#allocation10]
        $region52: #{tpu_custom_call.1} parent=27 // pred_fallthru
          _
        // Predicated region
        $region53: #{tpu_custom_call.1} parent=27 // pred_check
          %p781 = pneg %p135
        $region54: #{tpu_custom_call.1} parent=27 // pred_check_branch
          %783 = sbr.rel (%p781) target = $region56
        $region55: #{tpu_custom_call.1} parent=27 // pred_region
          %784 = dma.done [#allocation10], 128
        $region56: #{tpu_custom_call.1} parent=27 // pred_fallthru
          _
      $region28: #{tpu_custom_call.1} parent=5 // pred_fallthru
        _
      %p785 = scmp.le.s32.totalorder 2, %s18
      // Predicated region
      $region57: #{tpu_custom_call.1} parent=5 // pred_check
        %p786 = pneg %p785
      $region58: #{tpu_custom_call.1} parent=5 // pred_check_branch
        %788 = sbr.rel (%p786) target = $region60
      $region59: #{tpu_custom_call.1} parent=5 // pred_region
        %s789 = ssub.s32 %s18, 2
        // Predicated region
        $region61: #{tpu_custom_call.1} parent=59 // pred_check
          %p790 = pneg %p115
        $region62: #{tpu_custom_call.1} parent=59 // pred_check_branch
          %792 = sbr.rel (%p790) target = $region64
        $region63: #{tpu_custom_call.1} parent=59 // pred_region
          %s793 = sand.u32 %s100, 1
          %s794 = scalar_lea.sflag [#allocation5], %s793
          %s795 = sand.u32 %s100, 1
          %s796 = smul.addr %s795, 256
          %s797 = scalar_lea.vmem [#allocation8], %s796
          %798 = dma.done %s794, 4096
        $region64: #{tpu_custom_call.1} parent=59 // pred_fallthru
          _
      $region60: #{tpu_custom_call.1} parent=5 // pred_fallthru
        _
    $region6: #{tpu_custom_call.1} parent=1 // loop_footer
      %s22 = sadd.s32 1, %s18
    $region7: #{tpu_custom_call.1} parent=1 // loop_footer_branch
      %17 = sbr.rel target = $region3
    $region8: #{tpu_custom_call.1} parent=1 // loop_exit
      _
    %799 = vsyncpa [#allocation4], 1
    %s800 = scalar_lea.sflag [#allocation4], 1
    %801 = vsyncpa %s800, 1
    %802 = vsyncpa [#allocation7], 1
    %803 = vsyncpa [#allocation5], 1
    %s804 = scalar_lea.sflag [#allocation5], 1
    %805 = vsyncpa %s804, 1
    %806 = vsyncpa [#allocation10], 1

</llo_original>
